<compile_context>
chip_gen: v7x
topology: tpu7x:2x2x1
jax: 0.10.0
libtpu: 0.0.40
codegen_flags: <defaults>
</compile_context>

<pallas_src>
import math

import jax
import jax.numpy as jnp
from jax.experimental import pallas as pl
from jax.experimental.pallas import tpu as pltpu


def _round_up(x, m):
    return (x + m - 1) // m * m


def _sublane_multiple(itemsize):
    # 32-bit -> 8 sublanes, 16-bit -> 16, 8-bit -> 32.
    return 8 * max(4 // int(itemsize), 1)


def _vmem_config(per_buffer_bytes, vmem_limit_bytes):
    """Generation-aware (vmem_limit_bytes, per-input-pipeline-buffer budget)."""
    cap = None
    try:
        info = pltpu.get_tpu_info()
        cap = getattr(info, "vmem_capacity_bytes", None)
    except Exception:
        cap = None
    if cap is None:
        cap = 64 * 1024 * 1024            # conservative fallback: v7x-sized VMEM
    if cap >= 100 * 1024 * 1024:          # v5e / v6e: 128 MiB physical VMEM
        limit, budget = 64 * 1024 * 1024, 12 * 1024 * 1024
    else:                                 # v7x: 64 MiB physical VMEM per TC
        limit, budget = 48 * 1024 * 1024, 6 * 1024 * 1024
    if vmem_limit_bytes is not None:
        limit = vmem_limit_bytes
    if per_buffer_bytes is not None:
        budget = per_buffer_bytes
    return limit, budget


def _make_row_kernel(k, seg_len):
    """One-shot kernel: each block is (TM, k*seg_len) = k segments per row."""
    def kernel(first_ref, second_ref, out_ref):
        diff = (first_ref[...].astype(jnp.float32)
                - second_ref[...].astype(jnp.float32))
        d2 = diff * diff
        # Per-segment cross-lane reduce (static lane slices; exact f32).
        parts = [jnp.sum(d2[:, j * seg_len:(j + 1) * seg_len],
                         axis=-1, keepdims=True) for j in range(k)]
        dist2 = parts[0] if k == 1 else jnp.concatenate(parts, axis=-1)
        dist = jnp.sqrt(dist2)                                   # (TM, k)
        out_ref[...] = (1.0 / (1.0 + jnp.exp(-dist))).astype(out_ref.dtype)
    return kernel


def _make_htile_kernel(h_total, th):
    """Two-axis kernel for very large H: accumulate sum((a-b)^2) over H tiles."""
    def kernel(first_ref, second_ref, out_ref, acc_ref):
        h = pl.program_id(1)

        @pl.when(h == 0)
        def _():
            acc_ref[...] = jnp.zeros_like(acc_ref)

        diff = (first_ref[...].astype(jnp.float32)
                - second_ref[...].astype(jnp.float32))
        d2 = diff * diff
        if h_total % th != 0:
            # Mask the ragged last H tile (undefined VMEM past the array edge).
            col = h * th + jax.lax.broadcasted_iota(jnp.int32, d2.shape, 1)
            d2 = jnp.where(col < h_total, d2, 0.0)
        acc_ref[...] += jnp.sum(d2, axis=-1, keepdims=True)

        @pl.when(h == pl.num_programs(1) - 1)
        def _():
            dist = jnp.sqrt(acc_ref[...])
            out_ref[...] = (1.0 / (1.0 + jnp.exp(-dist))).astype(out_ref.dtype)
    return kernel


def euclidian_instruction_trace_difference(first, second, *,
                                           per_buffer_bytes=None,
                                           vmem_limit_bytes=None):
    """sigmoid(||first - second||_2 over the last axis). Shapes: (..., H) -> (...)."""
    assert first.shape == second.shape, (first.shape, second.shape)
    *lead, H = first.shape
    M = math.prod(lead)
    out_dtype = first.dtype
    itemsize = int(jnp.dtype(first.dtype).itemsize)
    in_sub = _sublane_multiple(itemsize)

    if M == 0:
        return jnp.zeros(tuple(lead), out_dtype)
    if H == 0:
        # Empty reduction: dist = 0 -> sigmoid(0) = 0.5 (matches torch).
        return jnp.full(tuple(lead), 0.5, out_dtype)

    vmem_limit, budget = _vmem_config(per_buffer_bytes, vmem_limit_bytes)

    cost = pl.CostEstimate(
        flops=3 * M * H,
        transcendentals=2 * M,
        bytes_accessed=2 * M * H * itemsize + M * itemsize,
    )

    hpad = max(_round_up(H, 128), 128)
    # If even a minimal (in_sub rows x padded-H) block exceeds the per-buffer
    # budget, tile the hidden dim too (reduction path).
    need_h_tile = hpad * itemsize * in_sub > budget

    # Small-H fold: pack k = 128//H consecutive rows into the 128-lane dim.
    if (not need_h_tile) and 8 <= H < 128 and 128 % H == 0 and M % (128 // H) == 0:
        k = 128 // H
    else:
        k = 1
    R = M // k                       # rows after folding
    W = k * H                        # lane width per (folded) row
    wpad = max(_round_up(W, 128), 128)

    f2 = first.reshape(R, W)
    s2 = second.reshape(R, W)

    if need_h_tile:
        # ---- Very large hidden size: grid = (rows, H-tiles). ----------------
        TM = R if R < 256 else 256
        TH = (budget // max(TM * itemsize, 1)) // 128 * 128
        TH = max(min(TH, _round_up(H, 128)), 128)
        GR = pl.cdiv(R, TM)
        GH = pl.cdiv(H, TH)
        out = pl.pallas_call(
            _make_htile_kernel(H, TH),
            out_shape=jax.ShapeDtypeStruct((GR * TM, 1), out_dtype),
            grid=(GR, GH),
            in_specs=[
                pl.BlockSpec((TM, TH), lambda i, h: (i, h)),
                pl.BlockSpec((TM, TH), lambda i, h: (i, h)),
            ],
            out_specs=pl.BlockSpec((TM, 1), lambda i, h: (i, 0)),
            scratch_shapes=[pltpu.VMEM((TM, 1), jnp.float32)],
            compiler_params=pltpu.CompilerParams(
                dimension_semantics=("parallel", "arbitrary"),
                vmem_limit_bytes=vmem_limit,
            ),
            cost_estimate=cost,
        )(f2, s2)
    else:
        # ---- Row-tiled path (covers the folded small-H case as well). -------
        rows_fit = budget // max(wpad * itemsize, 1)
        if rows_fit >= R:
            TM = R                                  # one block covers all rows
        elif rows_fit >= 128:
            TM = (rows_fit // 128) * 128
        else:
            TM = max((rows_fit // in_sub) * in_sub, in_sub)
        G = pl.cdiv(R, TM)
        out = pl.pallas_call(
            _make_row_kernel(k, H),
            out_shape=jax.ShapeDtypeStruct((G * TM, k), out_dtype),
            grid=(G,),
            in_specs=[
                pl.BlockSpec((TM, W), lambda i: (i, 0)),
                pl.BlockSpec((TM, W), lambda i: (i, 0)),
            ],
            out_specs=pl.BlockSpec((TM, k), lambda i: (i, 0)),
            compiler_params=pltpu.CompilerParams(
                # Rows are independent -> shard grid across v7x's 2 TensorCores.
                dimension_semantics=("parallel",),
                vmem_limit_bytes=vmem_limit,
            ),
            cost_estimate=cost,
        )(f2, s2)

    # Drop padded tail rows (garbage from the ragged last input block) and
    # restore the leading dims.
    return out.reshape(-1)[:M].reshape(tuple(lead))


def _reference(first, second):
    diff = jnp.sqrt(jnp.sum((first - second) ** 2, axis=-1))
    return jax.nn.sigmoid(diff)


if __name__ == "__main__":
    key = jax.random.PRNGKey(0)
    k1, k2, k3, k4, k5, k6 = jax.random.split(key, 6)

    # Main case (small-H folded path): batch=2, seq=8, hidden=32.
    B, S, H = 2, 8, 32
    first = jax.random.normal(k1, (B, S, H), dtype=jnp.float32)
    second = jax.random.normal(k2, (B, S, H), dtype=jnp.float32)
    out = jax.block_until_ready(euclidian_instruction_trace_difference(first, second))
    ref = _reference(first, second)
    assert out.shape == (B, S), out.shape
    assert jnp.allclose(out, ref, atol=1e-5, rtol=1e-5)

    # General row-tiled path (H >= 128, ragged row count).
    f2 = jax.random.normal(k3, (3, 5, 256), dtype=jnp.float32)
    s2 = jax.random.normal(k4, (3, 5, 256), dtype=jnp.float32)
    out2 = jax.block_until_ready(euclidian_instruction_trace_difference(f2, s2))
    assert out2.shape == (3, 5)
    assert jnp.allclose(out2, _reference(f2, s2), atol=1e-5, rtol=1e-5)

    # H-tiled reduction path (forced with a tiny per-buffer budget so the
    # accumulate/finalize + ragged-H masking code is exercised at small shapes).
    f3 = jax.random.normal(k5, (2, 10, 160), dtype=jnp.float32)
    s3 = jax.random.normal(k6, (2, 10, 160), dtype=jnp.float32)
    out3 = jax.block_until_ready(
        euclidian_instruction_trace_difference(f3, s3, per_buffer_bytes=4096))
    assert out3.shape == (2, 10)
    assert jnp.allclose(out3, _reference(f3, s3), atol=1e-5, rtol=1e-5)

    print("KERNEL_OK")
</pallas_src>

<mosaic_0001>
module attributes {stable_mosaic.version = 11 : i64} {
  func.func @kernel(%arg0: i32, %arg1: memref<4x128xf32, #tpu.memory_space<vmem>>, %arg2: memref<4x128xf32, #tpu.memory_space<vmem>>, %arg3: memref<4x4xf32, #tpu.memory_space<vmem>>) attributes {dimension_semantics = [#tpu.dimension_semantics<parallel>], iteration_bounds = array<i64: 1>, scalar_prefetch = 0 : i64, scratch_operands = 0 : i64, tpu.core_type = #tpu.core_type<tc>, window_params = [{transform_indices = @transform_0, window_bounds = array<i64: 4, 128>}, {transform_indices = @transform_1, window_bounds = array<i64: 4, 128>}, {transform_indices = @transform_2, window_bounds = array<i64: 4, 4>}]} {
    %c0 = arith.constant 0 : index
    %c0_0 = arith.constant 0 : index
    %0 = vector.load %arg1[%c0, %c0_0] : memref<4x128xf32, #tpu.memory_space<vmem>>, vector<4x128xf32>
    %c0_1 = arith.constant 0 : index
    %c0_2 = arith.constant 0 : index
    %1 = vector.load %arg2[%c0_1, %c0_2] : memref<4x128xf32, #tpu.memory_space<vmem>>, vector<4x128xf32>
    %2 = arith.subf %0, %1 : vector<4x128xf32>
    %3 = arith.mulf %2, %2 : vector<4x128xf32>
    %4 = vector.extract_strided_slice %3 {offsets = [0, 0], sizes = [4, 32], strides = [1, 1]} : vector<4x128xf32> to vector<4x32xf32>
    %cst = arith.constant dense<0.000000e+00> : vector<4xf32>
    %5 = vector.multi_reduction <add>, %4, %cst [1] : vector<4x32xf32> to vector<4xf32>
    %6 = vector.shape_cast %5 : vector<4xf32> to vector<4x1xf32>
    %7 = vector.extract_strided_slice %3 {offsets = [0, 32], sizes = [4, 32], strides = [1, 1]} : vector<4x128xf32> to vector<4x32xf32>
    %cst_3 = arith.constant dense<0.000000e+00> : vector<4xf32>
    %8 = vector.multi_reduction <add>, %7, %cst_3 [1] : vector<4x32xf32> to vector<4xf32>
    %9 = vector.shape_cast %8 : vector<4xf32> to vector<4x1xf32>
    %10 = vector.extract_strided_slice %3 {offsets = [0, 64], sizes = [4, 32], strides = [1, 1]} : vector<4x128xf32> to vector<4x32xf32>
    %cst_4 = arith.constant dense<0.000000e+00> : vector<4xf32>
    %11 = vector.multi_reduction <add>, %10, %cst_4 [1] : vector<4x32xf32> to vector<4xf32>
    %12 = vector.shape_cast %11 : vector<4xf32> to vector<4x1xf32>
    %13 = vector.extract_strided_slice %3 {offsets = [0, 96], sizes = [4, 32], strides = [1, 1]} : vector<4x128xf32> to vector<4x32xf32>
    %cst_5 = arith.constant dense<0.000000e+00> : vector<4xf32>
    %14 = vector.multi_reduction <add>, %13, %cst_5 [1] : vector<4x32xf32> to vector<4xf32>
    %15 = vector.shape_cast %14 : vector<4xf32> to vector<4x1xf32>
    %16 = tpu.concatenate %6, %9, %12, %15 in 1 : vector<4x1xf32>, vector<4x1xf32>, vector<4x1xf32>, vector<4x1xf32> -> vector<4x4xf32>
    %17 = math.sqrt %16 : vector<4x4xf32>
    %cst_6 = arith.constant 0.000000e+00 : f32
    %18 = vector.broadcast %cst_6 : f32 to vector<4x4xf32>
    %19 = arith.subf %18, %17 : vector<4x4xf32>
    %20 = math.exp %19 : vector<4x4xf32>
    %cst_7 = arith.constant 1.000000e+00 : f32
    %21 = vector.broadcast %cst_7 : f32 to vector<4x4xf32>
    %22 = arith.addf %21, %20 : vector<4x4xf32>
    %cst_8 = arith.constant 1.000000e+00 : f32
    %23 = vector.broadcast %cst_8 : f32 to vector<4x4xf32>
    %24 = arith.divf %23, %22 : vector<4x4xf32>
    %c0_9 = arith.constant 0 : index
    %c0_10 = arith.constant 0 : index
    %25 = vector.load %arg3[%c0_9, %c0_10] : memref<4x4xf32, #tpu.memory_space<vmem>>, vector<4x4xf32>
    tpu.vector_store %arg3[%c0_9, %c0_10], %24 {strides = array<i32>} : memref<4x4xf32, #tpu.memory_space<vmem>>, vector<4x4xf32>,
    return
  }
  func.func @transform_0(%arg0: i32) -> (i32, i32) {
    %c0_i32 = arith.constant 0 : i32
    %c0_i32_0 = arith.constant 0 : i32
    return %arg0, %c0_i32 : i32, i32
  }
  func.func @transform_1(%arg0: i32) -> (i32, i32) {
    %c0_i32 = arith.constant 0 : i32
    %c0_i32_0 = arith.constant 0 : i32
    return %arg0, %c0_i32 : i32, i32
  }
  func.func @transform_2(%arg0: i32) -> (i32, i32) {
    %c0_i32 = arith.constant 0 : i32
    %c0_i32_0 = arith.constant 0 : i32
    return %arg0, %c0_i32 : i32, i32
  }
}

</mosaic_0001>

<llo_original>
// kernel: tpu_custom_call.1
$region0: #{tpu_custom_call.1}
  #allocation0 [shape = 'u32[]', space=smem, size = 0x4, offset = 0x4, fixed_abs, tag = 'smem constant byte address 0x4 - core index']
  #allocation1 [shape = 'u32[144,128]{1,0:T(1,128)}', space=vmem, size = 0x12000, scoped, tag = 'internal scratch']
  %s0 = inlined_call_operand.hbm [shape: f32[4,128], index: 0, kind: input, shape index: {}]
  %s1 = inlined_call_operand.hbm [shape: f32[4,128], index: 1, kind: input, shape index: {}]
  %s2 = inlined_call_operand.hbm [shape: f32[4,4], index: 2, kind: output, shape index: {}]
  %s3 = sld [smem:[#allocation0]]
  $region26: #{tpu_custom_call.1} parent=0
    _
  %s5 = ssub.s32 1, %s3
  %s6 = scalar_select 0, %s5, %s3
  $region1: #{tpu_custom_call.1} parent=0
    #allocation2 [shape = 'u8[2048]{0}', space=vmem, size = 0x800, scoped, tag = 'input window, operand 0, single buffered']
    #allocation3 [shape = 's32[1]{0}', space=sflag, size = 0x4, scoped, tag = 'scoped memory for tpu_custom_call.1']
    #allocation4 [shape = 's32[1]{0}', space=sflag, size = 0x4, scoped, tag = 'scoped memory for tpu_custom_call.1']
    #allocation5 [shape = 'u8[2048]{0}', space=vmem, size = 0x800, scoped, tag = 'input window, operand 1, single buffered']
    #allocation6 [shape = 's32[1]{0}', space=sflag, size = 0x4, scoped, tag = 'scoped memory for tpu_custom_call.1']
    #allocation7 [shape = 'u8[2048]{0}', space=vmem, size = 0x800, scoped, tag = 'output window, operand 0, single buffered']
    %7 = vsyncpa [#allocation3], 0
    %8 = vsyncpa [#allocation6], 0
    %9 = vsyncpa [#allocation4], 0
    // Predicated region
    $region2: #{tpu_custom_call.1} parent=1 // pred_check
      _
    $region3: #{tpu_custom_call.1} parent=1 // pred_check_branch
      %11 = sbr.rel (0) target = $region5
    $region4: #{tpu_custom_call.1} parent=1 // pred_region
      %s13 = ssub.s32 64, 64
      %14 = vsyncadd [#allocation3], %s13
      %s16 = sshll.u32 [#allocation2], 4
      %s17 = int_to_ptr.vmem [resolvable:$true] %s16
      %19 = dma.hbm_to_vmem [thread:$0]  %s0, 64, %s17, [#allocation3]
    $region5: #{tpu_custom_call.1} parent=1 // pred_fallthru
      _
    // Predicated region
    $region6: #{tpu_custom_call.1} parent=1 // pred_check
      _
    $region7: #{tpu_custom_call.1} parent=1 // pred_check_branch
      %21 = sbr.rel (0) target = $region9
    $region8: #{tpu_custom_call.1} parent=1 // pred_region
      %s23 = ssub.s32 64, 64
      %24 = vsyncadd [#allocation6], %s23
      %s26 = sshll.u32 [#allocation5], 4
      %s27 = int_to_ptr.vmem [resolvable:$true] %s26
      %29 = dma.hbm_to_vmem [thread:$0]  %s1, 64, %s27, [#allocation6]
    $region9: #{tpu_custom_call.1} parent=1 // pred_fallthru
      _
    // Predicated region
    $region10: #{tpu_custom_call.1} parent=1 // pred_check
      _
    $region11: #{tpu_custom_call.1} parent=1 // pred_check_branch
      %31 = sbr.rel (0) target = $region13
    $region12: #{tpu_custom_call.1} parent=1 // pred_region
      %32 = dma.done [#allocation3], 64
    $region13: #{tpu_custom_call.1} parent=1 // pred_fallthru
      _
    // Predicated region
    $region14: #{tpu_custom_call.1} parent=1 // pred_check
      _
    $region15: #{tpu_custom_call.1} parent=1 // pred_check_branch
      %34 = sbr.rel (0) target = $region17
    $region16: #{tpu_custom_call.1} parent=1 // pred_region
      %35 = dma.done [#allocation6], 64
    $region17: #{tpu_custom_call.1} parent=1 // pred_fallthru
      _
    %v36 = vld [vmem:[#allocation2] sm:$0xf]
    %v37 = vld [vmem:[#allocation5] sm:$0xf]
    %v38 = vsub.f32 %v36, %v37
    %v39 = vmul.f32 %v38, %v38
    %vm40 = vcmask 257024
    %v41 = vsel %vm40, %v39, 0.0
    %42 = vadd.xlane.f32.xlu0 %v41
    %v43 = vpop.xlane.xlu0 %42
    %45 = vrot.lane.b32.xlu0 %v39, 96
    %v46 = vpop.permute.xlu0 %45
    %v48 = vsel %vm40, %v46, 0.0
    %49 = vadd.xlane.f32.xlu0 %v48
    %v50 = vpop.xlane.xlu0 %49
    %51 = vrot.lane.b32.xlu0 %v39, 64
    %v52 = vpop.permute.xlu0 %51
    %v54 = vsel %vm40, %v52, 0.0
    %55 = vadd.xlane.f32.xlu0 %v54
    %v56 = vpop.xlane.xlu0 %55
    %57 = vrot.lane.b32.xlu0 %v39, 32
    %v58 = vpop.permute.xlu0 %57
    %v60 = vsel %vm40, %v58, 0.0
    %61 = vadd.xlane.f32.xlu0 %v60
    %v62 = vpop.xlane.xlu0 %61
    %vm63 = vcmask 7168
    %v64 = vsel %vm63, %v43, %v50
    %vm65 = vcmask 15360
    %v66 = vsel %vm65, %v64, %v56
    %vm67 = vcmask 23552
    %v68 = vsel %vm67, %v66, %v62
    %v69 = vrsqrt.pop %v68
    %v70 = vmul.f32 %v68, %v69
    %vm71 = vcmp.eq.f32.partialorder %v68, inf
    %v72 = vsel %vm71, %v68, %v70
    %vm73 = vcmp.eq.f32.partialorder %v68, 0.0
    %v74 = vand.u32 %v68, 2147483648
    %v75 = vsel %vm73, %v74, %v72
    %v76 = vsub.f32 0.0, %v75
    %v77 = vmul.f32 %v76, 1.442695
    %v78 = vpow.pop %v77
    %v79 = vadd.f32 %v78, 1.0
    %v80 = vrcp.pop %v79
    %v81 = vmul.f32 1.0, %v80
    %vm82 = vcmask 27648
    %83 = vst.msk [vmem:[#allocation7] sm:$0xf] %vm82, %v81
    // Predicated region
    $region18: #{tpu_custom_call.1} parent=1 // pred_check
      _
    $region19: #{tpu_custom_call.1} parent=1 // pred_check_branch
      %85 = sbr.rel (0) target = $region21
    $region20: #{tpu_custom_call.1} parent=1 // pred_region
      %s87 = ssub.s32 64, 64
      %88 = vsyncadd [#allocation4], %s87
      %s90 = sshll.u32 [#allocation7], 4
      %s91 = int_to_ptr.vmem [resolvable:$true] %s90
      %93 = dma.vmem_to_hbm [thread:$0]  %s91, 64, %s2, [#allocation4]
    $region21: #{tpu_custom_call.1} parent=1 // pred_fallthru
      _
    // Predicated region
    $region22: #{tpu_custom_call.1} parent=1 // pred_check
      _
    $region23: #{tpu_custom_call.1} parent=1 // pred_check_branch
      %95 = sbr.rel (0) target = $region25
    $region24: #{tpu_custom_call.1} parent=1 // pred_region
      %96 = dma.done [#allocation4], 64
    $region25: #{tpu_custom_call.1} parent=1 // pred_fallthru
      _
    %97 = vsyncpa [#allocation3], 1
    %98 = vsyncpa [#allocation6], 1
    %99 = vsyncpa [#allocation4], 1

</llo_original>
